<compile_context>
chip_gen: v6e
topology: v6e:2x2x1
jax: 0.10.0
libtpu: 0.0.40
codegen_flags: <defaults>
</compile_context>

<pallas_src>
import jax
import jax.numpy as jnp
from jax.experimental import pallas as pl
from jax.experimental.pallas import tpu as pltpu


def edge_encoder_kernel(ids_ref, x_ref, w_euc_ref, w_ind_ref, o_ref):
    x = x_ref[...]                      # (tb, num_items), compute dtype
    ids = ids_ref[...]                  # (tb, 1), int32
    tb = x.shape[0]
    nu = w_ind_ref.shape[0]             # padded num_users (lane multiple)

    # One-hot built entirely in-register (never touches HBM).
    iota = jax.lax.broadcasted_iota(jnp.int32, (tb, nu), 1)
    oh = (iota == ids).astype(x.dtype)  # (tb, nu) of {0, 1}

    # Two MXU matmuls with f32 accumulation; the second is the W_ind row
    # gather expressed on the MXU (full-K, unmasked thanks to padding).
    euc = jnp.dot(x, w_euc_ref[...], preferred_element_type=jnp.float32)
    ind = jnp.dot(oh, w_ind_ref[...], preferred_element_type=jnp.float32)

    # Epilogue stays in f32; single cast at the final store (v5e-friendly).
    o_ref[...] = (euc + ind).astype(o_ref.dtype)


def edge_encoder(x, user_ids, w_euc, w_ind, *, tb=128,
                 compute_dtype=jnp.bfloat16):
    """x: (B, num_items) f32, user_ids: (B,) int -> (B, num_items) f32."""
    B, num_items = x.shape
    num_users, n_out = w_ind.shape
    assert w_euc.shape == (num_items, num_items) and n_out == num_items
    out_dtype = x.dtype

    # Cast MXU operands (bf16 by default: native MXU dtype, halves DMA bytes).
    xc = x.astype(compute_dtype)
    w_euc_c = w_euc.astype(compute_dtype)
    w_ind_c = w_ind.astype(compute_dtype)

    # Pad the user axis of W_ind to a lane multiple: padded one-hot columns
    # are always zero, so the result is unchanged.
    nu_pad = pl.cdiv(num_users, 128) * 128
    if nu_pad != num_users:
        w_ind_c = jnp.pad(w_ind_c, ((0, nu_pad - num_users), (0, 0)))

    # Batch tiling: pad B up to a multiple of tb (ragged-safe), slice later.
    ids = user_ids.astype(jnp.int32).reshape(B, 1)
    grid_b = pl.cdiv(B, tb)
    b_pad = grid_b * tb
    if b_pad != B:
        xc = jnp.pad(xc, ((0, b_pad - B), (0, 0)))
        ids = jnp.pad(ids, ((0, b_pad - B), (0, 0)))

    out = pl.pallas_call(
        edge_encoder_kernel,
        out_shape=jax.ShapeDtypeStruct((b_pad, num_items), out_dtype),
        grid=(grid_b,),
        in_specs=[
            pl.BlockSpec((tb, 1), lambda i: (i, 0)),                 # user ids tile
            pl.BlockSpec((tb, num_items), lambda i: (i, 0)),         # x tile
            pl.BlockSpec((num_items, num_items), lambda i: (0, 0)),  # W_euc resident
            pl.BlockSpec((nu_pad, num_items), lambda i: (0, 0)),     # W_ind resident
        ],
        out_specs=pl.BlockSpec((tb, num_items), lambda i: (i, 0)),
        compiler_params=pltpu.CompilerParams(
            dimension_semantics=("parallel",),       # batch tiles -> megacore
            vmem_limit_bytes=64 * 1024 * 1024,       # explicit scoped VMEM
        ),
    )(ids, xc, w_euc_c, w_ind_c)

    return out[:B] if b_pad != B else out


if __name__ == "__main__":
    # Small shapes consistent with the module; B chosen so the batch grid has
    # >= 2 parallel tiles at tb=128 (keeps both v7x TensorCores busy).
    B = 256
    num_items = 128
    num_users = 64
    latent_dim = 32  # unused by forward (kept for parity with __init__)

    key = jax.random.PRNGKey(0)
    k_x, k_ids, k_weuc, k_wind = jax.random.split(key, 4)

    # Deterministic parameter init (torch.normal(0, 1) equivalent).
    w_euc = jax.random.normal(k_weuc, (num_items, num_items), dtype=jnp.float32)
    w_ind = jax.random.normal(k_wind, (num_users, num_items), dtype=jnp.float32)

    # input[0]: float features over items; input[1]: integer user ids.
    x = jax.random.normal(k_x, (B, num_items), dtype=jnp.float32)
    user_ids = jax.random.randint(k_ids, (B,), 0, num_users, dtype=jnp.int32)

    # Plain-JAX f32 reference.
    ref = x @ w_euc + jax.nn.one_hot(user_ids, num_users, dtype=jnp.float32) @ w_ind

    # f32-operand path: tight tolerance vs. the f32 reference.
    out_f32 = jax.block_until_ready(
        edge_encoder(x, user_ids, w_euc, w_ind, compute_dtype=jnp.float32))
    assert out_f32.shape == (B, num_items)
    assert jnp.allclose(out_f32, ref, atol=1e-3, rtol=1e-3)

    # bf16-operand path (native MXU dtype), f32 accumulation: looser tolerance.
    out_bf16 = jax.block_until_ready(
        edge_encoder(x, user_ids, w_euc, w_ind, compute_dtype=jnp.bfloat16))
    assert out_bf16.shape == (B, num_items)
    assert jnp.allclose(out_bf16, ref, atol=0.5, rtol=5e-2)

    print("KERNEL_OK")
</pallas_src>

<mosaic_0001>
module attributes {stable_mosaic.version = 11 : i64} {
  func.func @edge_encoder_kernel(%arg0: i32, %arg1: memref<128x1xi32, #tpu.memory_space<vmem>>, %arg2: memref<128x128xf32, #tpu.memory_space<vmem>>, %arg3: memref<128x128xf32, #tpu.memory_space<vmem>>, %arg4: memref<128x128xf32, #tpu.memory_space<vmem>>, %arg5: memref<128x128xf32, #tpu.memory_space<vmem>>) attributes {dimension_semantics = [#tpu.dimension_semantics<parallel>], iteration_bounds = array<i64: 2>, scalar_prefetch = 0 : i64, scratch_operands = 0 : i64, tpu.core_type = #tpu.core_type<tc>, window_params = [{transform_indices = @transform_0, window_bounds = array<i64: 128, 1>}, {transform_indices = @transform_1, window_bounds = array<i64: 128, 128>}, {pipeline_mode = #tpu.pipeline_mode<synchronous>, transform_indices = @transform_2, window_bounds = array<i64: 128, 128>}, {pipeline_mode = #tpu.pipeline_mode<synchronous>, transform_indices = @transform_3, window_bounds = array<i64: 128, 128>}, {transform_indices = @transform_4, window_bounds = array<i64: 128, 128>}]} {
    %c0 = arith.constant 0 : index
    %c0_0 = arith.constant 0 : index
    %0 = vector.load %arg2[%c0, %c0_0] : memref<128x128xf32, #tpu.memory_space<vmem>>, vector<128x128xf32>
    %c0_1 = arith.constant 0 : index
    %c0_2 = arith.constant 0 : index
    %1 = vector.load %arg1[%c0_1, %c0_2] : memref<128x1xi32, #tpu.memory_space<vmem>>, vector<128x1xi32>
    %2 = tpu.iota {dimensions = array<i32: 1>} : vector<128x128xi32>
    %3 = vector.broadcast %1 : vector<128x1xi32> to vector<128x128xi32>
    %4 = arith.cmpi eq, %2, %3 : vector<128x128xi32>
    %5 = arith.extui %4 : vector<128x128xi1> to vector<128x128xi32>
    %6 = arith.sitofp %5 : vector<128x128xi32> to vector<128x128xf32>
    %c0_3 = arith.constant 0 : index
    %c0_4 = arith.constant 0 : index
    %7 = vector.load %arg3[%c0_3, %c0_4] : memref<128x128xf32, #tpu.memory_space<vmem>>, vector<128x128xf32>
    %cst = arith.constant dense<0.000000e+00> : vector<128x128xf32>
    %8 = tpu.matmul %0, %7, %cst {dimension_numbers = #tpu.dot_dimension_numbers<[1], [0], [0], [1], [0, 0, 1, 1], [], []>} : vector<128x128xf32>, vector<128x128xf32>, vector<128x128xf32> -> vector<128x128xf32>
    %c0_5 = arith.constant 0 : index
    %c0_6 = arith.constant 0 : index
    %9 = vector.load %arg4[%c0_5, %c0_6] : memref<128x128xf32, #tpu.memory_space<vmem>>, vector<128x128xf32>
    %cst_7 = arith.constant dense<0.000000e+00> : vector<128x128xf32>
    %10 = tpu.matmul %6, %9, %cst_7 {dimension_numbers = #tpu.dot_dimension_numbers<[1], [0], [0], [1], [0, 0, 1, 1], [], []>} : vector<128x128xf32>, vector<128x128xf32>, vector<128x128xf32> -> vector<128x128xf32>
    %11 = arith.addf %8, %10 : vector<128x128xf32>
    %c0_8 = arith.constant 0 : index
    %c0_9 = arith.constant 0 : index
    %12 = vector.load %arg5[%c0_8, %c0_9] : memref<128x128xf32, #tpu.memory_space<vmem>>, vector<128x128xf32>
    tpu.vector_store %arg5[%c0_8, %c0_9], %11 {strides = array<i32>} : memref<128x128xf32, #tpu.memory_space<vmem>>, vector<128x128xf32>,
    return
  }
  func.func @transform_0(%arg0: i32) -> (i32, i32) {
    %c0_i32 = arith.constant 0 : i32
    %c0_i32_0 = arith.constant 0 : i32
    return %arg0, %c0_i32 : i32, i32
  }
  func.func @transform_1(%arg0: i32) -> (i32, i32) {
    %c0_i32 = arith.constant 0 : i32
    %c0_i32_0 = arith.constant 0 : i32
    return %arg0, %c0_i32 : i32, i32
  }
  func.func @transform_2(%arg0: i32) -> (i32, i32) {
    %c0_i32 = arith.constant 0 : i32
    %c0_i32_0 = arith.constant 0 : i32
    %c0_i32_1 = arith.constant 0 : i32
    return %c0_i32, %c0_i32_0 : i32, i32
  }
  func.func @transform_3(%arg0: i32) -> (i32, i32) {
    %c0_i32 = arith.constant 0 : i32
    %c0_i32_0 = arith.constant 0 : i32
    %c0_i32_1 = arith.constant 0 : i32
    return %c0_i32, %c0_i32_0 : i32, i32
  }
  func.func @transform_4(%arg0: i32) -> (i32, i32) {
    %c0_i32 = arith.constant 0 : i32
    %c0_i32_0 = arith.constant 0 : i32
    return %arg0, %c0_i32 : i32, i32
  }
}

</mosaic_0001>

<llo_original>
// kernel: tpu_custom_call.1
$region0: #{tpu_custom_call.1}
  #allocation0 [shape = 'u32[]', space=smem, size = 0x4, offset = 0x4, fixed_abs, tag = 'smem constant byte address 0x4 - core index']
  #allocation1 [shape = 'u32[144,128]{1,0:T(1,128)}', space=vmem, size = 0x12000, scoped, tag = 'internal scratch']
  %s0 = inlined_call_operand.vmem [shape: s32[256,1], index: 0, kind: input, shape index: {}]
  %s1 = inlined_call_operand.vmem [shape: f32[256,128], index: 1, kind: input, shape index: {}]
  %s2 = inlined_call_operand.hbm [shape: f32[128,128], index: 2, kind: input, shape index: {}]
  %s3 = inlined_call_operand.hbm [shape: f32[128,128], index: 3, kind: input, shape index: {}]
  %s4 = inlined_call_operand.hbm [shape: f32[256,128], index: 4, kind: output, shape index: {}]
  %s5 = sld [smem:[#allocation0]]
  $region57: #{tpu_custom_call.1} parent=0
    _
  %s7 = ssub.s32 1, %s5
  %s8 = scalar_select 0, %s7, %s5
  $region1: #{tpu_custom_call.1} parent=0
    #allocation2 [shape = 'u8[65536]{0}', space=vmem, size = 0x10000, scoped, tag = 'input window, operand 2, single buffered']
    #allocation3 [shape = 's32[2]{0}', space=sflag, size = 0x8, scoped, tag = 'scoped memory for tpu_custom_call.1']
    #allocation4 [shape = 's32[2]{0}', space=sflag, size = 0x8, scoped, tag = 'scoped memory for tpu_custom_call.1']
    #allocation5 [shape = 'u8[65536]{0}', space=vmem, size = 0x10000, scoped, tag = 'input window, operand 3, single buffered']
    #allocation6 [shape = 's32[1]{0}', space=sflag, size = 0x4, scoped, tag = 'scoped memory for tpu_custom_call.1']
    #allocation7 [shape = 'u8[131072]{0}', space=vmem, size = 0x20000, scoped, tag = 'output window, operand 0']
    %9 = vsyncpa [#allocation3], 0
    %10 = vsyncpa [#allocation6], 0
    %11 = vsyncpa [#allocation4], 0
    %s12 = scalar_lea.sflag [#allocation4], 1
    %13 = vsyncpa %s12, 0
    loop: start=0, step=1, limit=4
    $region2: #{tpu_custom_call.1} parent=1 // loop_pre_header
      _
    $region3: #{tpu_custom_call.1} parent=1 // loop_header
      %s15 = sphi 0, %s19
      %p16 = scmp.ge.s32.totalorder %s15, 4
      %s25 = sphi 0, %s27
      %s28 = sphi 0, %s25
      %s29 = sphi 0, %s28
      %s45 = sphi 0, %s29
      %s51 = sphi 0, %s53
      %s54 = sphi 0, %s51
      %s55 = sphi 0, %s54
      %s71 = sphi 0, %s55
      %s75 = sphi 0, %s75
      %s77 = sphi 0, %s75
      %s78 = sphi 0, %s77
      %s92 = sphi 0, %s78
      %s96 = sphi 0, %s96
      %s98 = sphi 0, %s96
      %s99 = sphi 0, %s98
      %s113 = sphi 0, %s99
      %s119 = sphi 0, %s121
      %s122 = sphi 0, %s119
      %s123 = sphi 0, %s122
      %s139 = sphi 0, %s123
    $region4: #{tpu_custom_call.1} parent=1 // loop_header_branch
      %18 = sbr.rel (%p16) target = $region8
    $region5: #{tpu_custom_call.1} parent=1 // loop_body
      %s20 = ssub.s32 %s15, 1
      %s21 = ssub.s32 %s15, 2
      %s22 = sadd.s32 %s15, 1
      %s23 = ssub.s32 %s15, %s22
      %p24 = scmp.eq.s32.totalorder %s23, 0
      %s26 = sadd.s32 %s25, 1
      %s27 = scalar_select %p24, %s25, %s26
      %p30 = pneg %p24
      %p31 = scmp.eq.s32.totalorder %s15, 1
      %p32 = por %p30, %p31
      %p33 = scmp.ne.s32.totalorder %s25, %s28
      %p34 = scmp.eq.s32.totalorder %s15, 0
      %p35 = por %p33, %p34
      %p36 = scmp.ne.s32.totalorder %s25, %s28
      %p37 = scmp.eq.s32.totalorder %s20, 1
      %p38 = por %p36, %p37
      %p39 = scmp.ne.s32.totalorder %s28, %s29
      %p40 = scmp.eq.s32.totalorder %s20, 0
      %p41 = por %p39, %p40
      %p42 = scmp.ne.s32.totalorder %s28, %s29
      %p43 = scmp.eq.s32.totalorder %s21, 1
      %p44 = por %p42, %p43
      %p46 = scmp.ne.s32.totalorder %s29, %s45
      %p47 = scmp.eq.s32.totalorder %s21, 0
      %p48 = por %p46, %p47
      %s49 = ssub.s32 %s15, %s22
      %p50 = scmp.eq.s32.totalorder %s49, 0
      %s52 = sadd.s32 %s51, 1
      %s53 = scalar_select %p50, %s51, %s52
      %p56 = pneg %p50
      %p57 = scmp.eq.s32.totalorder %s15, 1
      %p58 = por %p56, %p57
      %p59 = scmp.ne.s32.totalorder %s51, %s54
      %p60 = scmp.eq.s32.totalorder %s15, 0
      %p61 = por %p59, %p60
      %p62 = scmp.ne.s32.totalorder %s51, %s54
      %p63 = scmp.eq.s32.totalorder %s20, 1
      %p64 = por %p62, %p63
      %p65 = scmp.ne.s32.totalorder %s54, %s55
      %p66 = scmp.eq.s32.totalorder %s20, 0
      %p67 = por %p65, %p66
      %p68 = scmp.ne.s32.totalorder %s54, %s55
      %p69 = scmp.eq.s32.totalorder %s21, 1
      %p70 = por %p68, %p69
      %p72 = scmp.ne.s32.totalorder %s55, %s71
      %p73 = scmp.eq.s32.totalorder %s21, 0
      %p74 = por %p72, %p73
      %s76 = sadd.s32 %s75, 1
      %p79 = scmp.eq.s32.totalorder %s15, 1
      %p80 = scmp.ne.s32.totalorder %s75, %s77
      %p81 = scmp.eq.s32.totalorder %s15, 0
      %p82 = por %p80, %p81
      %p83 = scmp.ne.s32.totalorder %s75, %s77
      %p84 = scmp.eq.s32.totalorder %s20, 1
      %p85 = por %p83, %p84
      %p86 = scmp.ne.s32.totalorder %s77, %s78
      %p87 = scmp.eq.s32.totalorder %s20, 0
      %p88 = por %p86, %p87
      %p89 = scmp.ne.s32.totalorder %s77, %s78
      %p90 = scmp.eq.s32.totalorder %s21, 1
      %p91 = por %p89, %p90
      %p93 = scmp.ne.s32.totalorder %s78, %s92
      %p94 = scmp.eq.s32.totalorder %s21, 0
      %p95 = por %p93, %p94
      %s97 = sadd.s32 %s96, 1
      %p100 = scmp.eq.s32.totalorder %s15, 1
      %p101 = scmp.ne.s32.totalorder %s96, %s98
      %p102 = scmp.eq.s32.totalorder %s15, 0
      %p103 = por %p101, %p102
      %p104 = scmp.ne.s32.totalorder %s96, %s98
      %p105 = scmp.eq.s32.totalorder %s20, 1
      %p106 = por %p104, %p105
      %p107 = scmp.ne.s32.totalorder %s98, %s99
      %p108 = scmp.eq.s32.totalorder %s20, 0
      %p109 = por %p107, %p108
      %p110 = scmp.ne.s32.totalorder %s98, %s99
      %p111 = scmp.eq.s32.totalorder %s21, 1
      %p112 = por %p110, %p111
      %p114 = scmp.ne.s32.totalorder %s99, %s113
      %p115 = scmp.eq.s32.totalorder %s21, 0
      %p116 = por %p114, %p115
      %s117 = ssub.s32 %s15, %s22
      %p118 = scmp.eq.s32.totalorder %s117, 0
      %s120 = sadd.s32 %s119, 1
      %s121 = scalar_select %p118, %s119, %s120
      %p124 = pneg %p118
      %p125 = scmp.eq.s32.totalorder %s15, 1
      %p126 = por %p124, %p125
      %p127 = scmp.ne.s32.totalorder %s119, %s122
      %p128 = scmp.eq.s32.totalorder %s15, 0
      %p129 = por %p127, %p128
      %p130 = scmp.ne.s32.totalorder %s119, %s122
      %p131 = scmp.eq.s32.totalorder %s20, 1
      %p132 = por %p130, %p131
      %p133 = scmp.ne.s32.totalorder %s122, %s123
      %p134 = scmp.eq.s32.totalorder %s20, 0
      %p135 = por %p133, %p134
      %p136 = scmp.ne.s32.totalorder %s122, %s123
      %p137 = scmp.eq.s32.totalorder %s21, 1
      %p138 = por %p136, %p137
      %p140 = scmp.ne.s32.totalorder %s123, %s139
      %p141 = scmp.eq.s32.totalorder %s21, 0
      %p142 = por %p140, %p141
      %p143 = scmp.le.s32.totalorder 1, %s15
      %p144 = scmp.lt.s32.totalorder %s15, 3
      %p145 = pnand %p143, %p144
      %p146 = pneg %p145
      // Predicated region
      $region9: #{tpu_custom_call.1} parent=5 // pred_check
        _
      $region10: #{tpu_custom_call.1} parent=5 // pred_check_branch
        %148 = sbr.rel (%p145) target = $region12
      $region11: #{tpu_custom_call.1} parent=5 // pred_region
        %s149 = ssub.s32 %s15, 1
        // Predicated region
        $region13: #{tpu_custom_call.1} parent=11 // pred_check
          %p150 = pneg %p88
        $region14: #{tpu_custom_call.1} parent=11 // pred_check_branch
          %152 = sbr.rel (%p150) target = $region16
        $region15: #{tpu_custom_call.1} parent=11 // pred_region
          %s154 = ssub.s32 2048, 2048
          %155 = vsyncadd [#allocation3], %s154
          %s156 = sshll.u32 [#allocation2], 4
          %s157 = int_to_ptr.vmem [resolvable:$true] %s156
          %162 = dma.hbm_to_vmem [thread:$0]  %s2, 2048, %s157, [#allocation3], 128, 128, 8
        $region16: #{tpu_custom_call.1} parent=11 // pred_fallthru
          _
        // Predicated region
        $region17: #{tpu_custom_call.1} parent=11 // pred_check
          %p163 = pneg %p109
        $region18: #{tpu_custom_call.1} parent=11 // pred_check_branch
          %165 = sbr.rel (%p163) target = $region20
        $region19: #{tpu_custom_call.1} parent=11 // pred_region
          %s167 = ssub.s32 2048, 2048
          %168 = vsyncadd [#allocation6], %s167
          %s169 = sshll.u32 [#allocation5], 4
          %s170 = int_to_ptr.vmem [resolvable:$true] %s169
          %175 = dma.hbm_to_vmem [thread:$0]  %s3, 2048, %s170, [#allocation6], 128, 128, 8
        $region20: #{tpu_custom_call.1} parent=11 // pred_fallthru
          _
      $region12: #{tpu_custom_call.1} parent=5 // pred_fallthru
        _
      %p176 = scmp.lt.s32.totalorder %s15, 2
      // Predicated region
      $region21: #{tpu_custom_call.1} parent=5 // pred_check
        %p177 = pneg %p176
      $region22: #{tpu_custom_call.1} parent=5 // pred_check_branch
        %179 = sbr.rel (%p177) target = $region24
      $region23: #{tpu_custom_call.1} parent=5 // pred_region
        // Predicated region
        $region25: #{tpu_custom_call.1} parent=23 // pred_check
          %p180 = pneg %p35
        $region26: #{tpu_custom_call.1} parent=23 // pred_check_branch
          %182 = sbr.rel (%p180) target = $region28
        $region27: #{tpu_custom_call.1} parent=23 // pred_region
          %s183 = smul.u32 16, %s15
          %p184 = scmp.lt.s32.totalorder %s183, 31
          %s185 = scalar_select %p184, %s183, 31
          %s186 = smul.addr %s185, 8
          %s187 = scalar_lea.vmem %s0, %s186
          %s188 = smul.u32 16, %s15
        $region28: #{tpu_custom_call.1} parent=23 // pred_fallthru
          _
        // Predicated region
        $region29: #{tpu_custom_call.1} parent=23 // pred_check
          %p189 = pneg %p61
        $region30: #{tpu_custom_call.1} parent=23 // pred_check_branch
          %191 = sbr.rel (%p189) target = $region32
        $region31: #{tpu_custom_call.1} parent=23 // pred_region
          %s192 = smul.u32 16, %s15
          %p193 = scmp.lt.s32.totalorder %s192, 31
          %s194 = scalar_select %p193, %s192, 31
          %s195 = smul.addr %s194, 8
          %s196 = scalar_lea.vmem %s1, %s195
          %s197 = smul.u32 16, %s15
        $region32: #{tpu_custom_call.1} parent=23 // pred_fallthru
          _
      $region24: #{tpu_custom_call.1} parent=5 // pred_fallthru
        _
      %p198 = scmp.le.s32.totalorder 1, %s15
      %p199 = scmp.lt.s32.totalorder %s15, 3
      %p200 = pnand %p198, %p199
      %p201 = pneg %p200
      // Predicated region
      $region33: #{tpu_custom_call.1} parent=5 // pred_check
        _
      $region34: #{tpu_custom_call.1} parent=5 // pred_check_branch
        %203 = sbr.rel (%p200) target = $region36
      $region35: #{tpu_custom_call.1} parent=5 // pred_region
        %s204 = ssub.s32 %s15, 1
        // Predicated region
        $region37: #{tpu_custom_call.1} parent=35 // pred_check
          %p205 = pneg %p88
        $region38: #{tpu_custom_call.1} parent=35 // pred_check_branch
          %207 = sbr.rel (%p205) target = $region40
        $region39: #{tpu_custom_call.1} parent=35 // pred_region
          %208 = dma.done [#allocation3], 2048
        $region40: #{tpu_custom_call.1} parent=35 // pred_fallthru
          _
        // Predicated region
        $region41: #{tpu_custom_call.1} parent=35 // pred_check
          %p209 = pneg %p109
        $region42: #{tpu_custom_call.1} parent=35 // pred_check_branch
          %211 = sbr.rel (%p209) target = $region44
        $region43: #{tpu_custom_call.1} parent=35 // pred_region
          %212 = dma.done [#allocation6], 2048
        $region44: #{tpu_custom_call.1} parent=35 // pred_fallthru
          _
        %s213 = smul.u32 16, %s20
        %p214 = scmp.lt.s32.totalorder %s213, 31
        %s215 = scalar_select %p214, %s213, 31
        %s216 = smul.addr %s215, 8
        %s217 = scalar_lea.vmem %s0, %s216
        %p218 = pneg %p41
        %p219 = pneg %p38
        %s220 = smul.u32 16, %s20
        %p221 = scmp.lt.s32.totalorder %s220, 31
        %s222 = scalar_select %p221, %s220, 31
        %s223 = smul.addr %s222, 8
        %s224 = scalar_lea.vmem %s1, %s223
        %p225 = pneg %p67
        %p226 = pneg %p64
        %p227 = pneg %p88
        %p228 = pneg %p85
        %p229 = pneg %p109
        %p230 = pneg %p106
        %p231 = pneg %p135
        %p232 = pneg %p132
        %s233 = sand.u32 %s122, 1
        %s234 = scalar_lea.sflag [#allocation4], %s233
        %s235 = sand.u32 %s122, 1
        %s236 = smul.addr %s235, 128
        %s237 = scalar_lea.vmem [#allocation7], %s236
        %s238 = smul.u32 16, %s20
        %p239 = scmp.lt.s32.totalorder %s238, 31
        %s240 = scalar_select %p239, %s238, 31
        %s241 = smul.addr %s240, 8
        %s242 = scalar_lea.vmem %s0, %s241
        %s243 = smul.u32 16, %s20
        %s244 = smul.u32 16, %s20
        %p245 = scmp.lt.s32.totalorder %s244, 31
        %s246 = scalar_select %p245, %s244, 31
        %s247 = smul.addr %s246, 8
        %s248 = scalar_lea.vmem %s1, %s247
        %s249 = smul.u32 16, %s20
        %s250 = smul.u32 16, %s20
        %v251 = vld [vmem:[%s248] sm:$0xff]
        %v252 = vld [vmem:[%s248 + $0x8] sm:$0xff]
        %v253 = vld [vmem:[%s248 + $0x10] sm:$0xff]
        %v254 = vld [vmem:[%s248 + $0x18] sm:$0xff]
        %v255 = vld [vmem:[%s248 + $0x20] sm:$0xff]
        %v256 = vld [vmem:[%s248 + $0x28] sm:$0xff]
        %v257 = vld [vmem:[%s248 + $0x30] sm:$0xff]
        %v258 = vld [vmem:[%s248 + $0x38] sm:$0xff]
        %v259 = vld [vmem:[%s248 + $0x40] sm:$0xff]
        %v260 = vld [vmem:[%s248 + $0x48] sm:$0xff]
        %v261 = vld [vmem:[%s248 + $0x50] sm:$0xff]
        %v262 = vld [vmem:[%s248 + $0x58] sm:$0xff]
        %v263 = vld [vmem:[%s248 + $0x60] sm:$0xff]
        %v264 = vld [vmem:[%s248 + $0x68] sm:$0xff]
        %v265 = vld [vmem:[%s248 + $0x70] sm:$0xff]
        %v266 = vld [vmem:[%s248 + $0x78] sm:$0xff]
        %v267 = vld [vmem:[%s242] sm:$0xff]
        %v268 = vld [vmem:[%s242 + $0x8] sm:$0xff]
        %v269 = vld [vmem:[%s242 + $0x10] sm:$0xff]
        %v270 = vld [vmem:[%s242 + $0x18] sm:$0xff]
        %v271 = vld [vmem:[%s242 + $0x20] sm:$0xff]
        %v272 = vld [vmem:[%s242 + $0x28] sm:$0xff]
        %v273 = vld [vmem:[%s242 + $0x30] sm:$0xff]
        %v274 = vld [vmem:[%s242 + $0x38] sm:$0xff]
        %v275 = vld [vmem:[%s242 + $0x40] sm:$0xff]
        %v276 = vld [vmem:[%s242 + $0x48] sm:$0xff]
        %v277 = vld [vmem:[%s242 + $0x50] sm:$0xff]
        %v278 = vld [vmem:[%s242 + $0x58] sm:$0xff]
        %v279 = vld [vmem:[%s242 + $0x60] sm:$0xff]
        %v280 = vld [vmem:[%s242 + $0x68] sm:$0xff]
        %v281 = vld [vmem:[%s242 + $0x70] sm:$0xff]
        %v282 = vld [vmem:[%s242 + $0x78] sm:$0xff]
        %v283 = vlaneseq
        %v284 = vand.u32 %v283, 127
        %285 = vset.pattern.permute.xlu0 0
        %286 = vperm.xlu0 %285, %v267
        %v287 = vpop.permute.xlu0 %286
        %288 = vset.pattern.permute.xlu0 0
        %289 = vperm.xlu0 %288, %v268
        %v290 = vpop.permute.xlu0 %289
        %291 = vset.pattern.permute.xlu0 0
        %292 = vperm.xlu0 %291, %v269
        %v293 = vpop.permute.xlu0 %292
        %294 = vset.pattern.permute.xlu0 0
        %295 = vperm.xlu0 %294, %v270
        %v296 = vpop.permute.xlu0 %295
        %297 = vset.pattern.permute.xlu0 0
        %298 = vperm.xlu0 %297, %v271
        %v299 = vpop.permute.xlu0 %298
        %300 = vset.pattern.permute.xlu0 0
        %301 = vperm.xlu0 %300, %v272
        %v302 = vpop.permute.xlu0 %301
        %303 = vset.pattern.permute.xlu0 0
        %304 = vperm.xlu0 %303, %v273
        %v305 = vpop.permute.xlu0 %304
        %306 = vset.pattern.permute.xlu0 0
        %307 = vperm.xlu0 %306, %v274
        %v308 = vpop.permute.xlu0 %307
        %309 = vset.pattern.permute.xlu0 0
        %310 = vperm.xlu0 %309, %v275
        %v311 = vpop.permute.xlu0 %310
        %312 = vset.pattern.permute.xlu0 0
        %313 = vperm.xlu0 %312, %v276
        %v314 = vpop.permute.xlu0 %313
        %315 = vset.pattern.permute.xlu0 0
        %316 = vperm.xlu0 %315, %v277
        %v317 = vpop.permute.xlu0 %316
        %318 = vset.pattern.permute.xlu0 0
        %319 = vperm.xlu0 %318, %v278
        %v320 = vpop.permute.xlu0 %319
        %321 = vset.pattern.permute.xlu0 0
        %322 = vperm.xlu0 %321, %v279
        %v323 = vpop.permute.xlu0 %322
        %324 = vset.pattern.permute.xlu0 0
        %325 = vperm.xlu0 %324, %v280
        %v326 = vpop.permute.xlu0 %325
        %327 = vset.pattern.permute.xlu0 0
        %328 = vperm.xlu0 %327, %v281
        %v329 = vpop.permute.xlu0 %328
        %330 = vset.pattern.permute.xlu0 0
        %331 = vperm.xlu0 %330, %v282
        %v332 = vpop.permute.xlu0 %331
        %vm333 = vcmp.eq.s32.totalorder %v284, %v287
        %vm334 = vcmp.eq.s32.totalorder %v284, %v290
        %vm335 = vcmp.eq.s32.totalorder %v284, %v293
        %vm336 = vcmp.eq.s32.totalorder %v284, %v296
        %vm337 = vcmp.eq.s32.totalorder %v284, %v299
        %vm338 = vcmp.eq.s32.totalorder %v284, %v302
        %vm339 = vcmp.eq.s32.totalorder %v284, %v305
        %vm340 = vcmp.eq.s32.totalorder %v284, %v308
        %vm341 = vcmp.eq.s32.totalorder %v284, %v311
        %vm342 = vcmp.eq.s32.totalorder %v284, %v314
        %vm343 = vcmp.eq.s32.totalorder %v284, %v317
        %vm344 = vcmp.eq.s32.totalorder %v284, %v320
        %vm345 = vcmp.eq.s32.totalorder %v284, %v323
        %vm346 = vcmp.eq.s32.totalorder %v284, %v326
        %vm347 = vcmp.eq.s32.totalorder %v284, %v329
        %vm348 = vcmp.eq.s32.totalorder %v284, %v332
        %v349 = vsel %vm333, 1, 0
        %v350 = vsel %vm334, 1, 0
        %v351 = vsel %vm335, 1, 0
        %v352 = vsel %vm336, 1, 0
        %v353 = vsel %vm337, 1, 0
        %v354 = vsel %vm338, 1, 0
        %v355 = vsel %vm339, 1, 0
        %v356 = vsel %vm340, 1, 0
        %v357 = vsel %vm341, 1, 0
        %v358 = vsel %vm342, 1, 0
        %v359 = vsel %vm343, 1, 0
        %v360 = vsel %vm344, 1, 0
        %v361 = vsel %vm345, 1, 0
        %v362 = vsel %vm346, 1, 0
        %v363 = vsel %vm347, 1, 0
        %v364 = vsel %vm348, 1, 0
        %v365 = vcvt.s32.f32 %v349
        %v366 = vcvt.s32.f32 %v350
        %v367 = vcvt.s32.f32 %v351
        %v368 = vcvt.s32.f32 %v352
        %v369 = vcvt.s32.f32 %v353
        %v370 = vcvt.s32.f32 %v354
        %v371 = vcvt.s32.f32 %v355
        %v372 = vcvt.s32.f32 %v356
        %v373 = vcvt.s32.f32 %v357
        %v374 = vcvt.s32.f32 %v358
        %v375 = vcvt.s32.f32 %v359
        %v376 = vcvt.s32.f32 %v360
        %v377 = vcvt.s32.f32 %v361
        %v378 = vcvt.s32.f32 %v362
        %v379 = vcvt.s32.f32 %v363
        %v380 = vcvt.s32.f32 %v364
        %v381 = vld [vmem:[#allocation2] sm:$0xff]
        %v382 = vld [vmem:[#allocation2 + $0x8] sm:$0xff]
        %v383 = vld [vmem:[#allocation2 + $0x10] sm:$0xff]
        %v384 = vld [vmem:[#allocation2 + $0x18] sm:$0xff]
        %v385 = vld [vmem:[#allocation2 + $0x20] sm:$0xff]
        %v386 = vld [vmem:[#allocation2 + $0x28] sm:$0xff]
        %v387 = vld [vmem:[#allocation2 + $0x30] sm:$0xff]
        %v388 = vld [vmem:[#allocation2 + $0x38] sm:$0xff]
        %v389 = vld [vmem:[#allocation2 + $0x40] sm:$0xff]
        %v390 = vld [vmem:[#allocation2 + $0x48] sm:$0xff]
        %v391 = vld [vmem:[#allocation2 + $0x50] sm:$0xff]
        %v392 = vld [vmem:[#allocation2 + $0x58] sm:$0xff]
        %v393 = vld [vmem:[#allocation2 + $0x60] sm:$0xff]
        %v394 = vld [vmem:[#allocation2 + $0x68] sm:$0xff]
        %v395 = vld [vmem:[#allocation2 + $0x70] sm:$0xff]
        %v396 = vld [vmem:[#allocation2 + $0x78] sm:$0xff]
        %v397 = vld [vmem:[#allocation5] sm:$0xff]
        %v398 = vld [vmem:[#allocation5 + $0x8] sm:$0xff]
        %v399 = vld [vmem:[#allocation5 + $0x10] sm:$0xff]
        %v400 = vld [vmem:[#allocation5 + $0x18] sm:$0xff]
        %v401 = vld [vmem:[#allocation5 + $0x20] sm:$0xff]
        %v402 = vld [vmem:[#allocation5 + $0x28] sm:$0xff]
        %v403 = vld [vmem:[#allocation5 + $0x30] sm:$0xff]
        %v404 = vld [vmem:[#allocation5 + $0x38] sm:$0xff]
        %v405 = vld [vmem:[#allocation5 + $0x40] sm:$0xff]
        %v406 = vld [vmem:[#allocation5 + $0x48] sm:$0xff]
        %v407 = vld [vmem:[#allocation5 + $0x50] sm:$0xff]
        %v408 = vld [vmem:[#allocation5 + $0x58] sm:$0xff]
        %v409 = vld [vmem:[#allocation5 + $0x60] sm:$0xff]
        %v410 = vld [vmem:[#allocation5 + $0x68] sm:$0xff]
        %v411 = vld [vmem:[#allocation5 + $0x70] sm:$0xff]
        %v412 = vld [vmem:[#allocation5 + $0x78] sm:$0xff]
        %413 = vmatprep.subr.mxu0 0.0
        %414 = vmatpush1.msra.mxu0 %v412
        %415 = vmatprep.subr.mxu0 0.0
        %416 = vmatpush1.msra.mxu0 %v411
        %417 = vmatprep.subr.mxu0 0.0
        %418 = vmatpush1.msra.mxu0 %v410
        %419 = vmatprep.subr.mxu0 0.0
        %420 = vmatpush1.msra.mxu0 %v409
        %421 = vmatprep.subr.mxu0 0.0
        %422 = vmatpush1.msra.mxu0 %v408
        %423 = vmatprep.subr.mxu0 0.0
        %424 = vmatpush1.msra.mxu0 %v407
        %425 = vmatprep.subr.mxu0 0.0
        %426 = vmatpush1.msra.mxu0 %v406
        %427 = vmatprep.subr.mxu0 0.0
        %428 = vmatpush1.msra.mxu0 %v405
        %429 = vmatprep.subr.mxu0 0.0
        %430 = vmatpush1.msra.mxu0 %v404
        %431 = vmatprep.subr.mxu0 0.0
        %432 = vmatpush1.msra.mxu0 %v403
        %433 = vmatprep.subr.mxu0 0.0
        %434 = vmatpush1.msra.mxu0 %v402
        %435 = vmatprep.subr.mxu0 0.0
        %436 = vmatpush1.msra.mxu0 %v401
        %437 = vmatprep.subr.mxu0 0.0
        %438 = vmatpush1.msra.mxu0 %v400
        %439 = vmatprep.subr.mxu0 0.0
        %440 = vmatpush1.msra.mxu0 %v399
        %441 = vmatprep.subr.mxu0 0.0
        %442 = vmatpush1.msra.mxu0 %v398
        %443 = vmatprep.subr.mxu0 0.0
        %444 = vmatpush1.msra.mxu0 %v397
        %445 = vmatprep.subr.mxu0 0.0
        %446 = vmatpush2.msra.mxu0 0.0
        %447 = vmatprep.subr.mxu0 0.0
        %448 = vmatpush2.msra.mxu0 0.0
        %449 = vmatprep.subr.mxu0 0.0
        %450 = vmatpush2.msra.mxu0 0.0
        %451 = vmatprep.subr.mxu0 0.0
        %452 = vmatpush2.msra.mxu0 0.0
        %453 = vmatprep.subr.mxu0 0.0
        %454 = vmatpush2.msra.mxu0 0.0
        %455 = vmatprep.subr.mxu0 0.0
        %456 = vmatpush2.msra.mxu0 0.0
        %457 = vmatprep.subr.mxu0 0.0
        %458 = vmatpush2.msra.mxu0 0.0
        %459 = vmatprep.subr.mxu0 0.0
        %460 = vmatpush2.msra.mxu0 0.0
        %461 = vmatprep.subr.mxu0 0.0
        %462 = vmatpush2.msra.mxu0 0.0
        %463 = vmatprep.subr.mxu0 0.0
        %464 = vmatpush2.msra.mxu0 0.0
        %465 = vmatprep.subr.mxu0 0.0
        %466 = vmatpush2.msra.mxu0 0.0
        %467 = vmatprep.subr.mxu0 0.0
        %468 = vmatpush2.msra.mxu0 0.0
        %469 = vmatprep.subr.mxu0 0.0
        %470 = vmatpush2.msra.mxu0 0.0
        %471 = vmatprep.subr.mxu0 0.0
        %472 = vmatpush2.msra.mxu0 0.0
        %473 = vmatprep.subr.mxu0 0.0
        %474 = vmatpush2.msra.mxu0 0.0
        %475 = vmatprep.subr.mxu0 0.0
        %476 = vmatpush2.msra.mxu0 0.0
        %477 = vmatprep.mubr.f32.mxu0 0.0
        %478 = vmatmul.mubr.f32.gmra.mxu0 %v365
        %v479 = vpop.f32.mrf.mxu0
        %v480 = vadd.f32 0.0, %v479
        %v481 = vpop.f32.mrf.mxu0
        %482 = vmatprep.mubr.f32.mxu0 0.0
        %483 = vmatmul.mubr.f32.gmra.mxu0 %v366
        %v484 = vpop.f32.mrf.mxu0
        %v485 = vadd.f32 0.0, %v484
        %v486 = vpop.f32.mrf.mxu0
        %487 = vmatprep.mubr.f32.mxu0 0.0
        %488 = vmatmul.mubr.f32.gmra.mxu0 %v367
        %v489 = vpop.f32.mrf.mxu0
        %v490 = vadd.f32 0.0, %v489
        %v491 = vpop.f32.mrf.mxu0
        %492 = vmatprep.mubr.f32.mxu0 0.0
        %493 = vmatmul.mubr.f32.gmra.mxu0 %v368
        %v494 = vpop.f32.mrf.mxu0
        %v495 = vadd.f32 0.0, %v494
        %v496 = vpop.f32.mrf.mxu0
        %497 = vmatprep.mubr.f32.mxu0 0.0
        %498 = vmatmul.mubr.f32.gmra.mxu0 %v369
        %v499 = vpop.f32.mrf.mxu0
        %v500 = vadd.f32 0.0, %v499
        %v501 = vpop.f32.mrf.mxu0
        %502 = vmatprep.mubr.f32.mxu0 0.0
        %503 = vmatmul.mubr.f32.gmra.mxu0 %v370
        %v504 = vpop.f32.mrf.mxu0
        %v505 = vadd.f32 0.0, %v504
        %v506 = vpop.f32.mrf.mxu0
        %507 = vmatprep.mubr.f32.mxu0 0.0
        %508 = vmatmul.mubr.f32.gmra.mxu0 %v371
        %v509 = vpop.f32.mrf.mxu0
        %v510 = vadd.f32 0.0, %v509
        %v511 = vpop.f32.mrf.mxu0
        %512 = vmatprep.mubr.f32.mxu0 0.0
        %513 = vmatmul.mubr.f32.gmra.mxu0 %v372
        %v514 = vpop.f32.mrf.mxu0
        %v515 = vadd.f32 0.0, %v514
        %v516 = vpop.f32.mrf.mxu0
        %517 = vmatprep.mubr.f32.mxu0 0.0
        %518 = vmatmul.mubr.f32.gmra.mxu0 %v373
        %v519 = vpop.f32.mrf.mxu0
        %v520 = vadd.f32 0.0, %v519
        %v521 = vpop.f32.mrf.mxu0
        %522 = vmatprep.mubr.f32.mxu0 0.0
        %523 = vmatmul.mubr.f32.gmra.mxu0 %v374
        %v524 = vpop.f32.mrf.mxu0
        %v525 = vadd.f32 0.0, %v524
        %v526 = vpop.f32.mrf.mxu0
        %527 = vmatprep.mubr.f32.mxu0 0.0
        %528 = vmatmul.mubr.f32.gmra.mxu0 %v375
        %v529 = vpop.f32.mrf.mxu0
        %v530 = vadd.f32 0.0, %v529
        %v531 = vpop.f32.mrf.mxu0
        %532 = vmatprep.mubr.f32.mxu0 0.0
        %533 = vmatmul.mubr.f32.gmra.mxu0 %v376
        %v534 = vpop.f32.mrf.mxu0
        %v535 = vadd.f32 0.0, %v534
        %v536 = vpop.f32.mrf.mxu0
        %537 = vmatprep.mubr.f32.mxu0 0.0
        %538 = vmatmul.mubr.f32.gmra.mxu0 %v377
        %v539 = vpop.f32.mrf.mxu0
        %v540 = vadd.f32 0.0, %v539
        %v541 = vpop.f32.mrf.mxu0
        %542 = vmatprep.mubr.f32.mxu0 0.0
        %543 = vmatmul.mubr.f32.gmra.mxu0 %v378
        %v544 = vpop.f32.mrf.mxu0
        %v545 = vadd.f32 0.0, %v544
        %v546 = vpop.f32.mrf.mxu0
        %547 = vmatprep.mubr.f32.mxu0 0.0
        %548 = vmatmul.mubr.f32.gmra.mxu0 %v379
        %v549 = vpop.f32.mrf.mxu0
        %v550 = vadd.f32 0.0, %v549
        %v551 = vpop.f32.mrf.mxu0
        %552 = vmatprep.mubr.f32.mxu0 0.0
        %553 = vmatmul.mubr.f32.gmra.mxu0 %v380
        %v554 = vpop.f32.mrf.mxu0
        %v555 = vadd.f32 0.0, %v554
        %v556 = vpop.f32.mrf.mxu0
        %557 = vdwg.mxu0
        %558 = vmatprep.subr.mxu0 0.0
        %559 = vmatpush1.msra.mxu0 %v396
        %560 = vmatprep.subr.mxu0 0.0
        %561 = vmatpush1.msra.mxu0 %v395
        %562 = vmatprep.subr.mxu0 0.0
        %563 = vmatpush1.msra.mxu0 %v394
        %564 = vmatprep.subr.mxu0 0.0
        %565 = vmatpush1.msra.mxu0 %v393
        %566 = vmatprep.subr.mxu0 0.0
        %567 = vmatpush1.msra.mxu0 %v392
        %568 = vmatprep.subr.mxu0 0.0
        %569 = vmatpush1.msra.mxu0 %v391
        %570 = vmatprep.subr.mxu0 0.0
        %571 = vmatpush1.msra.mxu0 %v390
        %572 = vmatprep.subr.mxu0 0.0
        %573 = vmatpush1.msra.mxu0 %v389
        %574 = vmatprep.subr.mxu0 0.0
        %575 = vmatpush1.msra.mxu0 %v388
        %576 = vmatprep.subr.mxu0 0.0
        %577 = vmatpush1.msra.mxu0 %v387
        %578 = vmatprep.subr.mxu0 0.0
        %579 = vmatpush1.msra.mxu0 %v386
        %580 = vmatprep.subr.mxu0 0.0
        %581 = vmatpush1.msra.mxu0 %v385
        %582 = vmatprep.subr.mxu0 0.0
        %583 = vmatpush1.msra.mxu0 %v384
        %584 = vmatprep.subr.mxu0 0.0
        %585 = vmatpush1.msra.mxu0 %v383
        %586 = vmatprep.subr.mxu0 0.0
        %587 = vmatpush1.msra.mxu0 %v382
        %588 = vmatprep.subr.mxu0 0.0
        %589 = vmatpush1.msra.mxu0 %v381
        %590 = vmatprep.subr.mxu0 0.0
        %591 = vmatpush2.msra.mxu0 0.0
        %592 = vmatprep.subr.mxu0 0.0
        %593 = vmatpush2.msra.mxu0 0.0
        %594 = vmatprep.subr.mxu0 0.0
        %595 = vmatpush2.msra.mxu0 0.0
        %596 = vmatprep.subr.mxu0 0.0
        %597 = vmatpush2.msra.mxu0 0.0
        %598 = vmatprep.subr.mxu0 0.0
        %599 = vmatpush2.msra.mxu0 0.0
        %600 = vmatprep.subr.mxu0 0.0
        %601 = vmatpush2.msra.mxu0 0.0
        %602 = vmatprep.subr.mxu0 0.0
        %603 = vmatpush2.msra.mxu0 0.0
        %604 = vmatprep.subr.mxu0 0.0
        %605 = vmatpush2.msra.mxu0 0.0
        %606 = vmatprep.subr.mxu0 0.0
        %607 = vmatpush2.msra.mxu0 0.0
        %608 = vmatprep.subr.mxu0 0.0
        %609 = vmatpush2.msra.mxu0 0.0
        %610 = vmatprep.subr.mxu0 0.0
        %611 = vmatpush2.msra.mxu0 0.0
        %612 = vmatprep.subr.mxu0 0.0
        %613 = vmatpush2.msra.mxu0 0.0
        %614 = vmatprep.subr.mxu0 0.0
        %615 = vmatpush2.msra.mxu0 0.0
        %616 = vmatprep.subr.mxu0 0.0
        %617 = vmatpush2.msra.mxu0 0.0
        %618 = vmatprep.subr.mxu0 0.0
        %619 = vmatpush2.msra.mxu0 0.0
        %620 = vmatprep.subr.mxu0 0.0
        %621 = vmatpush2.msra.mxu0 0.0
        %622 = vmatprep.mubr.f32.mxu0 0.0
        %623 = vmatmul.mubr.f32.gmra.mxu0 %v251
        %v624 = vpop.f32.mrf.mxu0
        %v625 = vadd.f32 %v480, %v624
        %v626 = vpop.f32.mrf.mxu0
        %627 = vmatprep.mubr.f32.mxu0 0.0
        %628 = vmatmul.mubr.f32.gmra.mxu0 %v252
        %v629 = vpop.f32.mrf.mxu0
        %v630 = vadd.f32 %v485, %v629
        %v631 = vpop.f32.mrf.mxu0
        %632 = vmatprep.mubr.f32.mxu0 0.0
        %633 = vmatmul.mubr.f32.gmra.mxu0 %v253
        %v634 = vpop.f32.mrf.mxu0
        %v635 = vadd.f32 %v490, %v634
        %v636 = vpop.f32.mrf.mxu0
        %637 = vmatprep.mubr.f32.mxu0 0.0
        %638 = vmatmul.mubr.f32.gmra.mxu0 %v254
        %v639 = vpop.f32.mrf.mxu0
        %v640 = vadd.f32 %v495, %v639
        %v641 = vpop.f32.mrf.mxu0
        %642 = vmatprep.mubr.f32.mxu0 0.0
        %643 = vmatmul.mubr.f32.gmra.mxu0 %v255
        %v644 = vpop.f32.mrf.mxu0
        %v645 = vadd.f32 %v500, %v644
        %v646 = vpop.f32.mrf.mxu0
        %647 = vmatprep.mubr.f32.mxu0 0.0
        %648 = vmatmul.mubr.f32.gmra.mxu0 %v256
        %v649 = vpop.f32.mrf.mxu0
        %v650 = vadd.f32 %v505, %v649
        %v651 = vpop.f32.mrf.mxu0
        %652 = vmatprep.mubr.f32.mxu0 0.0
        %653 = vmatmul.mubr.f32.gmra.mxu0 %v257
        %v654 = vpop.f32.mrf.mxu0
        %v655 = vadd.f32 %v510, %v654
        %v656 = vpop.f32.mrf.mxu0
        %657 = vmatprep.mubr.f32.mxu0 0.0
        %658 = vmatmul.mubr.f32.gmra.mxu0 %v258
        %v659 = vpop.f32.mrf.mxu0
        %v660 = vadd.f32 %v515, %v659
        %v661 = vpop.f32.mrf.mxu0
        %662 = vmatprep.mubr.f32.mxu0 0.0
        %663 = vmatmul.mubr.f32.gmra.mxu0 %v259
        %v664 = vpop.f32.mrf.mxu0
        %v665 = vadd.f32 %v520, %v664
        %v666 = vpop.f32.mrf.mxu0
        %667 = vmatprep.mubr.f32.mxu0 0.0
        %668 = vmatmul.mubr.f32.gmra.mxu0 %v260
        %v669 = vpop.f32.mrf.mxu0
        %v670 = vadd.f32 %v525, %v669
        %v671 = vpop.f32.mrf.mxu0
        %672 = vmatprep.mubr.f32.mxu0 0.0
        %673 = vmatmul.mubr.f32.gmra.mxu0 %v261
        %v674 = vpop.f32.mrf.mxu0
        %v675 = vadd.f32 %v530, %v674
        %v676 = vpop.f32.mrf.mxu0
        %677 = vmatprep.mubr.f32.mxu0 0.0
        %678 = vmatmul.mubr.f32.gmra.mxu0 %v262
        %v679 = vpop.f32.mrf.mxu0
        %v680 = vadd.f32 %v535, %v679
        %v681 = vpop.f32.mrf.mxu0
        %682 = vmatprep.mubr.f32.mxu0 0.0
        %683 = vmatmul.mubr.f32.gmra.mxu0 %v263
        %v684 = vpop.f32.mrf.mxu0
        %v685 = vadd.f32 %v540, %v684
        %v686 = vpop.f32.mrf.mxu0
        %687 = vmatprep.mubr.f32.mxu0 0.0
        %688 = vmatmul.mubr.f32.gmra.mxu0 %v264
        %v689 = vpop.f32.mrf.mxu0
        %v690 = vadd.f32 %v545, %v689
        %v691 = vpop.f32.mrf.mxu0
        %692 = vmatprep.mubr.f32.mxu0 0.0
        %693 = vmatmul.mubr.f32.gmra.mxu0 %v265
        %v694 = vpop.f32.mrf.mxu0
        %v695 = vadd.f32 %v550, %v694
        %v696 = vpop.f32.mrf.mxu0
        %697 = vmatprep.mubr.f32.mxu0 0.0
        %698 = vmatmul.mubr.f32.gmra.mxu0 %v266
        %v699 = vpop.f32.mrf.mxu0
        %v700 = vadd.f32 %v555, %v699
        %v701 = vpop.f32.mrf.mxu0
        %702 = vdwg.mxu0
        %703 = vst [vmem:[%s237] sm:$0xff] %v625
        %704 = vst [vmem:[%s237 + $0x8] sm:$0xff] %v630
        %705 = vst [vmem:[%s237 + $0x10] sm:$0xff] %v635
        %706 = vst [vmem:[%s237 + $0x18] sm:$0xff] %v640
        %707 = vst [vmem:[%s237 + $0x20] sm:$0xff] %v645
        %708 = vst [vmem:[%s237 + $0x28] sm:$0xff] %v650
        %709 = vst [vmem:[%s237 + $0x30] sm:$0xff] %v655
        %710 = vst [vmem:[%s237 + $0x38] sm:$0xff] %v660
        %711 = vst [vmem:[%s237 + $0x40] sm:$0xff] %v665
        %712 = vst [vmem:[%s237 + $0x48] sm:$0xff] %v670
        %713 = vst [vmem:[%s237 + $0x50] sm:$0xff] %v675
        %714 = vst [vmem:[%s237 + $0x58] sm:$0xff] %v680
        %715 = vst [vmem:[%s237 + $0x60] sm:$0xff] %v685
        %716 = vst [vmem:[%s237 + $0x68] sm:$0xff] %v690
        %717 = vst [vmem:[%s237 + $0x70] sm:$0xff] %v695
        %718 = vst [vmem:[%s237 + $0x78] sm:$0xff] %v700
        %s719 = sand.u32 %s122, 1
        %s720 = scalar_lea.sflag [#allocation4], %s719
        %s721 = sand.u32 %s122, 1
        %s722 = smul.addr %s721, 128
        %s723 = scalar_lea.vmem [#allocation7], %s722
        // Predicated region
        $region45: #{tpu_custom_call.1} parent=35 // pred_check
          %p724 = pneg %p132
        $region46: #{tpu_custom_call.1} parent=35 // pred_check_branch
          %726 = sbr.rel (%p724) target = $region48
        $region47: #{tpu_custom_call.1} parent=35 // pred_region
          %s727 = smul.u32 16, %s20
          %s729 = ssub.s32 2048, 2048
          %730 = vsyncadd %s720, %s729
          %s731 = smul.addr %s727, 128
          %s732 = scalar_lea.hbm %s4, %s731
          %s733 = sshll.u32 %s723, 4
          %s734 = int_to_ptr.vmem [resolvable:$true] %s733
          %739 = dma.vmem_to_hbm [thread:$0]  %s734, 2048, %s732, %s720, 128, 128, 8
        $region48: #{tpu_custom_call.1} parent=35 // pred_fallthru
          _
      $region36: #{tpu_custom_call.1} parent=5 // pred_fallthru
        _
      %p740 = scmp.le.s32.totalorder 2, %s15
      // Predicated region
      $region49: #{tpu_custom_call.1} parent=5 // pred_check
        %p741 = pneg %p740
      $region50: #{tpu_custom_call.1} parent=5 // pred_check_branch
        %743 = sbr.rel (%p741) target = $region52
      $region51: #{tpu_custom_call.1} parent=5 // pred_region
        %s744 = ssub.s32 %s15, 2
        // Predicated region
        $region53: #{tpu_custom_call.1} parent=51 // pred_check
          %p745 = pneg %p138
        $region54: #{tpu_custom_call.1} parent=51 // pred_check_branch
          %747 = sbr.rel (%p745) target = $region56
        $region55: #{tpu_custom_call.1} parent=51 // pred_region
          %s748 = sand.u32 %s123, 1
          %s749 = scalar_lea.sflag [#allocation4], %s748
          %s750 = sand.u32 %s123, 1
          %s751 = smul.addr %s750, 128
          %s752 = scalar_lea.vmem [#allocation7], %s751
          %753 = dma.done %s749, 2048
        $region56: #{tpu_custom_call.1} parent=51 // pred_fallthru
          _
      $region52: #{tpu_custom_call.1} parent=5 // pred_fallthru
        _
    $region6: #{tpu_custom_call.1} parent=1 // loop_footer
      %s19 = sadd.s32 1, %s15
    $region7: #{tpu_custom_call.1} parent=1 // loop_footer_branch
      %14 = sbr.rel target = $region3
    $region8: #{tpu_custom_call.1} parent=1 // loop_exit
      _
    %754 = vsyncpa [#allocation3], 1
    %s755 = scalar_lea.sflag [#allocation3], 1
    %756 = vsyncpa %s755, 1
    %757 = vsyncpa [#allocation6], 1
    %758 = vsyncpa [#allocation4], 1
    %s759 = scalar_lea.sflag [#allocation4], 1
    %760 = vsyncpa %s759, 1

</llo_original>
